<compile_context>
chip_gen: v6e
topology: v6e:2x2x1
jax: 0.10.0
libtpu: 0.0.40
codegen_flags: <defaults>
</compile_context>

<pallas_src>
import math

import jax
import jax.numpy as jnp
from jax import lax
from jax.experimental import pallas as pl
from jax.experimental.pallas import tpu as pltpu


HIDDEN = 128  # hidden_dim of every MLP in the PyTorch module


def _round_up(x, m):
    return ((x + m - 1) // m) * m


# ----------------------------- Pallas kernel -------------------------------

def _make_kernel(cfg):
    """Builds the kernel with static slab offsets / padded dims closed over."""
    h = cfg["h"]
    emb_pad = cfg["emb_pad"]
    sd_k = cfg["sd_k"]          # padded K of fused s/d layer 1 (= lanes of sd_in)
    c_k = cfg["c_k"]            # padded K of mlp_c layer 1 (= lanes of c_in)
    two_h = 2 * h
    two_emb = 2 * emb_pad
    o_sd1, o_sd2, o_e1, o_e2, o_c1, o_c2 = cfg["offsets"]

    def kernel(sd_ref, c_ref, w_ref, b_ref, out_ref):
        # sd_ref: (N, sd_k) bf16   c_ref: (Nc, c_k) bf16
        # w_ref : (rows, slab_w) bf16 weight slab   b_ref: (8, slab_w) f32
        def mm(x, w):
            return jnp.dot(x, w, preferred_element_type=jnp.float32)

        def relu_bf16(z):
            # bias-add / ReLU stay f32 (v5e has no bf16 VPU path); only the
            # value fed to the next MXU pass is packed to bf16.
            return jnp.maximum(z, 0.0).astype(jnp.bfloat16)

        # --- fused block-diag mlp_s / mlp_d (zeros in padding add nothing)
        a1 = relu_bf16(mm(sd_ref[...], w_ref[o_sd1:o_sd1 + sd_k, 0:two_h])
                       + b_ref[0:1, 0:two_h])                       # (N, 2h)
        sd = relu_bf16(mm(a1, w_ref[o_sd2:o_sd2 + two_h, 0:two_emb])
                       + b_ref[1:2, 0:two_emb])                     # (N, 2*emb_pad)

        # --- mlp_encoder
        e1 = relu_bf16(mm(sd, w_ref[o_e1:o_e1 + two_emb, 0:h])
                       + b_ref[2:3, 0:h])                           # (N, h)
        e2 = relu_bf16(mm(e1, w_ref[o_e2:o_e2 + h, 0:emb_pad])
                       + b_ref[3:4, 0:emb_pad])                     # (N, emb_pad) bf16

        # --- mlp_c
        c1 = relu_bf16(mm(c_ref[...], w_ref[o_c1:o_c1 + c_k, 0:h])
                       + b_ref[4:5, 0:h])                           # (Nc, h)
        c2 = relu_bf16(mm(c1, w_ref[o_c2:o_c2 + h, 0:emb_pad])
                       + b_ref[5:6, 0:emb_pad])                     # (Nc, emb_pad) bf16

        # --- sigmoid(c2 @ e2.T): bf16 x bf16 single MXU pass, f32 accumulate,
        #     f32 sigmoid epilogue (v5e-safe).  Padded lanes of c2/e2 are zero.
        logits = lax.dot_general(
            c2, e2,
            dimension_numbers=(((1,), (1,)), ((), ())),
            preferred_element_type=jnp.float32,
        )                                                           # (Nc, N)
        out_ref[...] = jax.nn.sigmoid(logits)

    return kernel


# --------------------------- one-time param packing --------------------------

def pack_params(params, node_list_len, embedding_len, hidden_dim=HIDDEN):
    """Pack all weights into one bf16 slab + one f32 bias slab.

    Called ONCE at parameter-load time (hoisted out of the per-call path).
    Every segment's row offset is a multiple of 128 so in-kernel static slices
    are (16,128)-tile aligned for bf16.
    """
    (ws1, bs1, ws2, bs2,
     wd1, bd1, wd2, bd2,
     we1, be1, we2, be2,
     wc1, bc1, wc2, bc2) = params

    nl = node_list_len
    h = hidden_dim
    emb = embedding_len
    emb_pad = _round_up(emb, 128)
    sd_k = _round_up(2 * nl, 128)     # padded lanes of the [s|d] input
    c_k = _round_up(nl, 128)          # padded lanes of the c input
    two_h = 2 * h
    two_emb = 2 * emb_pad
    slab_w = max(two_h, two_emb, 128)

    # Row offsets (all multiples of 128).
    o_sd1 = 0
    o_sd2 = o_sd1 + sd_k
    o_e1 = o_sd2 + two_h
    o_e2 = o_e1 + two_emb
    o_c1 = o_e2 + h
    o_c2 = o_c1 + c_k
    rows = o_c2 + h

    w = jnp.zeros((rows, slab_w), jnp.float32)
    # fused block-diag mlp_s / mlp_d layer 1
    w = w.at[o_sd1:o_sd1 + nl, 0:h].set(ws1)
    w = w.at[o_sd1 + nl:o_sd1 + 2 * nl, h:two_h].set(wd1)
    # fused block-diag layer 2 (each half's out-dim padded to emb_pad)
    w = w.at[o_sd2:o_sd2 + h, 0:emb].set(ws2)
    w = w.at[o_sd2 + h:o_sd2 + two_h, emb_pad:emb_pad + emb].set(wd2)
    # mlp_encoder layer 1 (rows scattered to the padded s2/d2 lane positions)
    w = w.at[o_e1:o_e1 + emb, 0:h].set(we1[:emb])
    w = w.at[o_e1 + emb_pad:o_e1 + emb_pad + emb, 0:h].set(we1[emb:])
    # mlp_encoder layer 2
    w = w.at[o_e2:o_e2 + h, 0:emb].set(we2)
    # mlp_c
    w = w.at[o_c1:o_c1 + nl, 0:h].set(wc1)
    w = w.at[o_c2:o_c2 + h, 0:emb].set(wc2)

    b = jnp.zeros((8, slab_w), jnp.float32)
    b = b.at[0, 0:h].set(bs1[0]).at[0, h:two_h].set(bd1[0])
    b = b.at[1, 0:emb].set(bs2[0]).at[1, emb_pad:emb_pad + emb].set(bd2[0])
    b = b.at[2, 0:h].set(be1[0])
    b = b.at[3, 0:emb].set(be2[0])
    b = b.at[4, 0:h].set(bc1[0])
    b = b.at[5, 0:emb].set(bc2[0])

    cfg = dict(nl=nl, h=h, emb=emb, emb_pad=emb_pad, sd_k=sd_k, c_k=c_k,
               offsets=(o_sd1, o_sd2, o_e1, o_e2, o_c1, o_c2), slab_w=slab_w)
    return w.astype(jnp.bfloat16), b, cfg


# ------------------------------- wrapper ------------------------------------

def model_wd_forward(s_embed, d_embed, c_list_embed, label, packed):
    # label is unused by the reference forward pass (kept for API fidelity).
    del label
    w_slab, b_slab, cfg = packed
    n = s_embed.shape[0]
    nc = c_list_embed.shape[0]
    nl = cfg["nl"]
    h = cfg["h"]
    emb = cfg["emb"]
    sd_k = cfg["sd_k"]
    c_k = cfg["c_k"]

    bf16 = jnp.bfloat16
    # Concatenate + zero-pad the K dims to 128 lanes (lane-dense loads, matches
    # the zero-padded rows of the weight slab) and cast to bf16 for the MXU.
    sd_in = jnp.zeros((n, sd_k), bf16)
    sd_in = (sd_in.at[:, :nl].set(s_embed.astype(bf16))
                  .at[:, nl:2 * nl].set(d_embed.astype(bf16)))
    c_in = jnp.zeros((nc, c_k), bf16).at[:, :nl].set(c_list_embed.astype(bf16))

    # Advisory cost: useful flops only (zero blocks of the fused layers and the
    # lane padding excluded); sigmoid ~ exp + reciprocal = 2 transcendentals.
    flops = 2 * (2 * n * nl * h + 2 * n * h * emb      # mlp_s + mlp_d
                 + n * (2 * emb) * h + n * h * emb     # mlp_encoder
                 + nc * nl * h + nc * h * emb          # mlp_c
                 + nc * n * emb)                       # final matmul
    bytes_accessed = int((sd_in.size + c_in.size + w_slab.size) * 2
                         + b_slab.size * 4 + nc * n * 4)
    cost = pl.CostEstimate(flops=flops, transcendentals=2 * nc * n,
                           bytes_accessed=bytes_accessed)

    vmem_spec = pl.BlockSpec(memory_space=pltpu.MemorySpace.VMEM)

    # TODO(synk): at production Nc/N, add a 2-D (Nc-tile, N-tile) grid with
    # dimension_semantics=("parallel", "parallel") so v7x's 2nd TensorCore is
    # used, size tiles against v7x's 64 MiB VMEM (set vmem_limit_bytes with
    # double-buffer headroom), keep the N output tile a multiple of 128 lanes
    # (unmasked vst), and compute e2 once (prologue call) instead of per tile.
    return pl.pallas_call(
        _make_kernel(cfg),
        out_shape=jax.ShapeDtypeStruct((nc, n), jnp.float32),
        in_specs=[vmem_spec] * 4,
        out_specs=vmem_spec,
        cost_estimate=cost,
    )(sd_in, c_in, w_slab, b_slab)


# ------------------------- deterministic param init -------------------------

def _init_linear(key, fan_in, fan_out):
    """PyTorch nn.Linear default init: U(-1/sqrt(fan_in), 1/sqrt(fan_in)).

    Weight stored transposed: (fan_in, fan_out) so x @ W == x @ W_pt.T.
    Bias stored as (1, fan_out).
    """
    kw, kb = jax.random.split(key)
    bound = 1.0 / math.sqrt(fan_in)
    w = jax.random.uniform(kw, (fan_in, fan_out), jnp.float32, -bound, bound)
    b = jax.random.uniform(kb, (1, fan_out), jnp.float32, -bound, bound)
    return w, b


def init_model_wd_params(key, node_list_len, embedding_len, hidden_dim=HIDDEN):
    keys = jax.random.split(key, 8)
    ws1, bs1 = _init_linear(keys[0], node_list_len, hidden_dim)       # mlp_s
    ws2, bs2 = _init_linear(keys[1], hidden_dim, embedding_len)
    wd1, bd1 = _init_linear(keys[2], node_list_len, hidden_dim)       # mlp_d
    wd2, bd2 = _init_linear(keys[3], hidden_dim, embedding_len)
    we1, be1 = _init_linear(keys[4], 2 * embedding_len, hidden_dim)   # mlp_encoder
    we2, be2 = _init_linear(keys[5], hidden_dim, embedding_len)
    wc1, bc1 = _init_linear(keys[6], node_list_len, hidden_dim)       # mlp_c
    wc2, bc2 = _init_linear(keys[7], hidden_dim, embedding_len)
    return [ws1, bs1, ws2, bs2,
            wd1, bd1, wd2, bd2,
            we1, be1, we2, be2,
            wc1, bc1, wc2, bc2]


# ----------------------------- reference (JAX, f32) --------------------------

def _reference_forward(s, d, c, params):
    (ws1, bs1, ws2, bs2,
     wd1, bd1, wd2, bd2,
     we1, be1, we2, be2,
     wc1, bc1, wc2, bc2) = params

    def mlp(x, w1, b1, w2, b2):
        hdn = jnp.maximum(x @ w1 + b1, 0.0)
        return jnp.maximum(hdn @ w2 + b2, 0.0)

    s2 = mlp(s, ws1, bs1, ws2, bs2)
    d2 = mlp(d, wd1, bd1, wd2, bd2)
    e2 = mlp(jnp.concatenate([s2, d2], axis=1), we1, be1, we2, be2)
    c2 = mlp(c, wc1, bc1, wc2, bc2)
    return jax.nn.sigmoid(c2 @ e2.T)


# --------------------------------- main --------------------------------------

if __name__ == "__main__":
    node_list_len = 32
    embedding_len = 16
    n_pairs = 8       # batch of (s, d) pairs
    n_candidates = 8  # rows of c_list_embed

    key = jax.random.PRNGKey(0)
    k_s, k_d, k_c, k_l, k_p = jax.random.split(key, 5)

    s_embed = jax.random.normal(k_s, (n_pairs, node_list_len), jnp.float32)
    d_embed = jax.random.normal(k_d, (n_pairs, node_list_len), jnp.float32)
    c_list_embed = jax.random.normal(k_c, (n_candidates, node_list_len), jnp.float32)
    label = jax.random.bernoulli(k_l, 0.5, (n_candidates, n_pairs)).astype(jnp.float32)

    params = init_model_wd_params(k_p, node_list_len, embedding_len)

    # Pack constant weights ONCE (hoisted out of the per-call path); the packed
    # slabs are baked into the jitted forward as constants.
    packed = pack_params(params, node_list_len, embedding_len)
    fwd = jax.jit(lambda s, d, c, l: model_wd_forward(s, d, c, l, packed))

    out = jax.block_until_ready(fwd(s_embed, d_embed, c_list_embed, label))

    ref = _reference_forward(s_embed, d_embed, c_list_embed, params)
    assert out.shape == (n_candidates, n_pairs)
    # bf16 MXU inputs (incl. the final dot) with f32 accumulation vs f32 ref.
    max_diff = float(jnp.max(jnp.abs(out - ref)))
    assert jnp.allclose(out, ref, atol=3e-2, rtol=0.0), (
        f"Pallas output mismatch: max|diff|={max_diff}")

    print("KERNEL_OK")
</pallas_src>

<mosaic_0001>
module attributes {stable_mosaic.version = 11 : i64} {
  func.func @kernel(%arg0: memref<8x128xbf16, #tpu.memory_space<vmem>>, %arg1: memref<8x128xbf16, #tpu.memory_space<vmem>>, %arg2: memref<1024x256xbf16, #tpu.memory_space<vmem>>, %arg3: memref<8x256xf32, #tpu.memory_space<vmem>>, %arg4: memref<8x8xf32, #tpu.memory_space<vmem>>) attributes {dimension_semantics = [], scalar_prefetch = 0 : i64, scratch_operands = 0 : i64, tpu.core_type = #tpu.core_type<tc>} {
    %c0 = arith.constant 0 : index
    %c0_0 = arith.constant 0 : index
    %0 = vector.load %arg0[%c0, %c0_0] : memref<8x128xbf16, #tpu.memory_space<vmem>>, vector<8x128xbf16>
    %c0_1 = arith.constant 0 : index
    %c0_2 = arith.constant 0 : index
    %1 = vector.load %arg2[%c0_1, %c0_2] : memref<1024x256xbf16, #tpu.memory_space<vmem>>, vector<128x256xbf16>
    %cst = arith.constant dense<0.000000e+00> : vector<8x256xf32>
    %2 = tpu.matmul %0, %1, %cst {dimension_numbers = #tpu.dot_dimension_numbers<[1], [0], [0], [1], [0, 0, 1, 1], [], []>} : vector<8x128xbf16>, vector<128x256xbf16>, vector<8x256xf32> -> vector<8x256xf32>
    %c0_3 = arith.constant 0 : index
    %c0_4 = arith.constant 0 : index
    %3 = vector.load %arg3[%c0_3, %c0_4] : memref<8x256xf32, #tpu.memory_space<vmem>>, vector<1x256xf32>
    %4 = vector.broadcast %3 : vector<1x256xf32> to vector<8x256xf32>
    %5 = arith.addf %2, %4 : vector<8x256xf32>
    %cst_5 = arith.constant 0.000000e+00 : f32
    %6 = vector.broadcast %cst_5 : f32 to vector<8x256xf32>
    %7 = arith.maximumf %5, %6 : vector<8x256xf32>
    %8 = arith.truncf %7 : vector<8x256xf32> to vector<8x256xbf16>
    %c128 = arith.constant 128 : index
    %c0_6 = arith.constant 0 : index
    %9 = vector.load %arg2[%c128, %c0_6] : memref<1024x256xbf16, #tpu.memory_space<vmem>>, vector<256x256xbf16>
    %cst_7 = arith.constant dense<0.000000e+00> : vector<8x256xf32>
    %10 = tpu.matmul %8, %9, %cst_7 {dimension_numbers = #tpu.dot_dimension_numbers<[1], [0], [0], [1], [0, 0, 1, 1], [], []>} : vector<8x256xbf16>, vector<256x256xbf16>, vector<8x256xf32> -> vector<8x256xf32>
    %c1 = arith.constant 1 : index
    %c0_8 = arith.constant 0 : index
    %11 = vector.load %arg3[%c1, %c0_8] : memref<8x256xf32, #tpu.memory_space<vmem>>, vector<1x256xf32>
    %12 = vector.broadcast %11 : vector<1x256xf32> to vector<8x256xf32>
    %13 = arith.addf %10, %12 : vector<8x256xf32>
    %cst_9 = arith.constant 0.000000e+00 : f32
    %14 = vector.broadcast %cst_9 : f32 to vector<8x256xf32>
    %15 = arith.maximumf %13, %14 : vector<8x256xf32>
    %16 = arith.truncf %15 : vector<8x256xf32> to vector<8x256xbf16>
    %c384 = arith.constant 384 : index
    %c0_10 = arith.constant 0 : index
    %17 = vector.load %arg2[%c384, %c0_10] : memref<1024x256xbf16, #tpu.memory_space<vmem>>, vector<256x128xbf16>
    %cst_11 = arith.constant dense<0.000000e+00> : vector<8x128xf32>
    %18 = tpu.matmul %16, %17, %cst_11 {dimension_numbers = #tpu.dot_dimension_numbers<[1], [0], [0], [1], [0, 0, 1, 1], [], []>} : vector<8x256xbf16>, vector<256x128xbf16>, vector<8x128xf32> -> vector<8x128xf32>
    %c2 = arith.constant 2 : index
    %c0_12 = arith.constant 0 : index
    %19 = vector.load %arg3[%c2, %c0_12] : memref<8x256xf32, #tpu.memory_space<vmem>>, vector<1x128xf32>
    %20 = vector.broadcast %19 : vector<1x128xf32> to vector<8x128xf32>
    %21 = arith.addf %18, %20 : vector<8x128xf32>
    %cst_13 = arith.constant 0.000000e+00 : f32
    %22 = vector.broadcast %cst_13 : f32 to vector<8x128xf32>
    %23 = arith.maximumf %21, %22 : vector<8x128xf32>
    %24 = arith.truncf %23 : vector<8x128xf32> to vector<8x128xbf16>
    %c640 = arith.constant 640 : index
    %c0_14 = arith.constant 0 : index
    %25 = vector.load %arg2[%c640, %c0_14] : memref<1024x256xbf16, #tpu.memory_space<vmem>>, vector<128x128xbf16>
    %cst_15 = arith.constant dense<0.000000e+00> : vector<8x128xf32>
    %26 = tpu.matmul %24, %25, %cst_15 {dimension_numbers = #tpu.dot_dimension_numbers<[1], [0], [0], [1], [0, 0, 1, 1], [], []>} : vector<8x128xbf16>, vector<128x128xbf16>, vector<8x128xf32> -> vector<8x128xf32>
    %c3 = arith.constant 3 : index
    %c0_16 = arith.constant 0 : index
    %27 = vector.load %arg3[%c3, %c0_16] : memref<8x256xf32, #tpu.memory_space<vmem>>, vector<1x128xf32>
    %28 = vector.broadcast %27 : vector<1x128xf32> to vector<8x128xf32>
    %29 = arith.addf %26, %28 : vector<8x128xf32>
    %cst_17 = arith.constant 0.000000e+00 : f32
    %30 = vector.broadcast %cst_17 : f32 to vector<8x128xf32>
    %31 = arith.maximumf %29, %30 : vector<8x128xf32>
    %32 = arith.truncf %31 : vector<8x128xf32> to vector<8x128xbf16>
    %c0_18 = arith.constant 0 : index
    %c0_19 = arith.constant 0 : index
    %33 = vector.load %arg1[%c0_18, %c0_19] : memref<8x128xbf16, #tpu.memory_space<vmem>>, vector<8x128xbf16>
    %c768 = arith.constant 768 : index
    %c0_20 = arith.constant 0 : index
    %34 = vector.load %arg2[%c768, %c0_20] : memref<1024x256xbf16, #tpu.memory_space<vmem>>, vector<128x128xbf16>
    %cst_21 = arith.constant dense<0.000000e+00> : vector<8x128xf32>
    %35 = tpu.matmul %33, %34, %cst_21 {dimension_numbers = #tpu.dot_dimension_numbers<[1], [0], [0], [1], [0, 0, 1, 1], [], []>} : vector<8x128xbf16>, vector<128x128xbf16>, vector<8x128xf32> -> vector<8x128xf32>
    %c4 = arith.constant 4 : index
    %c0_22 = arith.constant 0 : index
    %36 = vector.load %arg3[%c4, %c0_22] : memref<8x256xf32, #tpu.memory_space<vmem>>, vector<1x128xf32>
    %37 = vector.broadcast %36 : vector<1x128xf32> to vector<8x128xf32>
    %38 = arith.addf %35, %37 : vector<8x128xf32>
    %cst_23 = arith.constant 0.000000e+00 : f32
    %39 = vector.broadcast %cst_23 : f32 to vector<8x128xf32>
    %40 = arith.maximumf %38, %39 : vector<8x128xf32>
    %41 = arith.truncf %40 : vector<8x128xf32> to vector<8x128xbf16>
    %c896 = arith.constant 896 : index
    %c0_24 = arith.constant 0 : index
    %42 = vector.load %arg2[%c896, %c0_24] : memref<1024x256xbf16, #tpu.memory_space<vmem>>, vector<128x128xbf16>
    %cst_25 = arith.constant dense<0.000000e+00> : vector<8x128xf32>
    %43 = tpu.matmul %41, %42, %cst_25 {dimension_numbers = #tpu.dot_dimension_numbers<[1], [0], [0], [1], [0, 0, 1, 1], [], []>} : vector<8x128xbf16>, vector<128x128xbf16>, vector<8x128xf32> -> vector<8x128xf32>
    %c5 = arith.constant 5 : index
    %c0_26 = arith.constant 0 : index
    %44 = vector.load %arg3[%c5, %c0_26] : memref<8x256xf32, #tpu.memory_space<vmem>>, vector<1x128xf32>
    %45 = vector.broadcast %44 : vector<1x128xf32> to vector<8x128xf32>
    %46 = arith.addf %43, %45 : vector<8x128xf32>
    %cst_27 = arith.constant 0.000000e+00 : f32
    %47 = vector.broadcast %cst_27 : f32 to vector<8x128xf32>
    %48 = arith.maximumf %46, %47 : vector<8x128xf32>
    %49 = arith.truncf %48 : vector<8x128xf32> to vector<8x128xbf16>
    %cst_28 = arith.constant dense<0.000000e+00> : vector<8x8xf32>
    %50 = tpu.matmul %49, %32, %cst_28 {dimension_numbers = #tpu.dot_dimension_numbers<[1], [1], [0], [0], [0, 0, 1, 0], [], []>} : vector<8x128xbf16>, vector<8x128xbf16>, vector<8x8xf32> -> vector<8x8xf32>
    %51 = arith.negf %50 : vector<8x8xf32>
    %52 = math.exp %51 : vector<8x8xf32>
    %cst_29 = arith.constant 1.000000e+00 : f32
    %53 = vector.broadcast %cst_29 : f32 to vector<8x8xf32>
    %54 = arith.addf %53, %52 : vector<8x8xf32>
    %55 = arith.divf %53, %54 : vector<8x8xf32>
    %c0_30 = arith.constant 0 : index
    %c0_31 = arith.constant 0 : index
    %56 = vector.load %arg4[%c0_30, %c0_31] : memref<8x8xf32, #tpu.memory_space<vmem>>, vector<8x8xf32>
    tpu.vector_store %arg4[%c0_30, %c0_31], %55 {strides = array<i32>} : memref<8x8xf32, #tpu.memory_space<vmem>>, vector<8x8xf32>,
    return
  }
}

</mosaic_0001>

<llo_original>
// kernel: _lambda_.1
$region0: #{_lambda_.1}
  #allocation0 [shape = 'u32[]', space=smem, size = 0x4, offset = 0x4, fixed_abs, tag = 'smem constant byte address 0x4 - core index']
  #allocation1 [shape = 'u32[144,128]{1,0:T(1,128)}', space=vmem, size = 0x12000, scoped, tag = 'internal scratch']
  %s0 = inlined_call_operand.vmem [shape: bf16[8,128], index: 0, kind: input, shape index: {}]
  %s1 = inlined_call_operand.vmem [shape: bf16[8,128], index: 1, kind: input, shape index: {}]
  %s2 = inlined_call_operand.hbm [shape: bf16[1024,256], index: 2, kind: input, shape index: {}]
  %s3 = inlined_call_operand.vmem [shape: f32[8,256], index: 3, kind: input, shape index: {}]
  %s4 = inlined_call_operand.hbm [shape: f32[8,8], index: 4, kind: output, shape index: {}]
  %s5 = sld [smem:[#allocation0]]
  $region30: #{_lambda_.1} parent=0
    _
  %s7 = ssub.s32 1, %s5
  %s8 = scalar_select 0, %s7, %s5
  $region1: #{_lambda_.1} parent=0
    #allocation2 [shape = 'u8[524288]{0}', space=vmem, size = 0x80000, scoped, tag = 'input window, operand 2, single buffered']
    #allocation3 [shape = 's32[1]{0}', space=sflag, size = 0x4, scoped, tag = 'scoped memory for _lambda_.1']
    #allocation4 [shape = 's32[1]{0}', space=sflag, size = 0x4, scoped, tag = 'scoped memory for _lambda_.1']
    #allocation5 [shape = 'u8[4096]{0}', space=vmem, size = 0x1000, scoped, tag = 'output window, operand 0, single buffered']
    %9 = vsyncpa [#allocation3], 0
    %10 = vsyncpa [#allocation4], 0
    // Predicated region
    $region2: #{_lambda_.1} parent=1 // pred_check
      _
    $region3: #{_lambda_.1} parent=1 // pred_check_branch
      %12 = sbr.rel (0) target = $region5
    $region4: #{_lambda_.1} parent=1 // pred_region
      _
    $region5: #{_lambda_.1} parent=1 // pred_fallthru
      _
    // Predicated region
    $region6: #{_lambda_.1} parent=1 // pred_check
      _
    $region7: #{_lambda_.1} parent=1 // pred_check_branch
      %14 = sbr.rel (0) target = $region9
    $region8: #{_lambda_.1} parent=1 // pred_region
      _
    $region9: #{_lambda_.1} parent=1 // pred_fallthru
      _
    // Predicated region
    $region10: #{_lambda_.1} parent=1 // pred_check
      _
    $region11: #{_lambda_.1} parent=1 // pred_check_branch
      %16 = sbr.rel (0) target = $region13
    $region12: #{_lambda_.1} parent=1 // pred_region
      %s18 = ssub.s32 16384, 16384
      %19 = vsyncadd [#allocation3], %s18
      %s20 = sshll.u32 [#allocation2], 4
      %s21 = int_to_ptr.vmem [resolvable:$true] %s20
      %26 = dma.hbm_to_vmem [thread:$0]  %s2, 16384, %s21, [#allocation3], 128, 128, 8
    $region13: #{_lambda_.1} parent=1 // pred_fallthru
      _
    // Predicated region
    $region14: #{_lambda_.1} parent=1 // pred_check
      _
    $region15: #{_lambda_.1} parent=1 // pred_check_branch
      %28 = sbr.rel (0) target = $region17
    $region16: #{_lambda_.1} parent=1 // pred_region
      _
    $region17: #{_lambda_.1} parent=1 // pred_fallthru
      _
    // Predicated region
    $region18: #{_lambda_.1} parent=1 // pred_check
      _
    $region19: #{_lambda_.1} parent=1 // pred_check_branch
      %30 = sbr.rel (0) target = $region21
    $region20: #{_lambda_.1} parent=1 // pred_region
      %31 = dma.done [#allocation3], 16384
    $region21: #{_lambda_.1} parent=1 // pred_fallthru
      _
    %v33 = vld [vmem:[%s0] sm:$0xf]
    %v34 = vld [vmem:[#allocation2] sm:$0xff]
    %v35 = vld [vmem:[#allocation2 + $0x8] sm:$0xff]
    %v36 = vld [vmem:[#allocation2 + $0x10] sm:$0xff]
    %v37 = vld [vmem:[#allocation2 + $0x18] sm:$0xff]
    %v38 = vld [vmem:[#allocation2 + $0x20] sm:$0xff]
    %v39 = vld [vmem:[#allocation2 + $0x28] sm:$0xff]
    %v40 = vld [vmem:[#allocation2 + $0x30] sm:$0xff]
    %v41 = vld [vmem:[#allocation2 + $0x38] sm:$0xff]
    %v42 = vld [vmem:[#allocation2 + $0x40] sm:$0xff]
    %v43 = vld [vmem:[#allocation2 + $0x48] sm:$0xff]
    %v44 = vld [vmem:[#allocation2 + $0x50] sm:$0xff]
    %v45 = vld [vmem:[#allocation2 + $0x58] sm:$0xff]
    %v46 = vld [vmem:[#allocation2 + $0x60] sm:$0xff]
    %v47 = vld [vmem:[#allocation2 + $0x68] sm:$0xff]
    %v48 = vld [vmem:[#allocation2 + $0x70] sm:$0xff]
    %v49 = vld [vmem:[#allocation2 + $0x78] sm:$0xff]
    %v50 = vld [vmem:[%s3] ss:$8 sm:$0x3]
    %v52 = vlaneseq
    %v53 = vshrl.u32 %v52, 7
    %v54 = vsub.s32 0, %v53
    %v55 = vrot.slane %v50, %v54
    %v56 = vlaneseq
    %v57 = vshrl.u32 %v56, 7
    %v58 = vsub.s32 1, %v57
    %v59 = vrot.slane %v50, %v58
    %v78 = vunpack.c.l.b16 %v34
    %v79 = vunpack.c.h.b16 %v34
    %v80 = vunpack.c.l.b16 %v35
    %v81 = vunpack.c.h.b16 %v35
    %v82 = vunpack.c.l.b16 %v36
    %v83 = vunpack.c.h.b16 %v36
    %v84 = vunpack.c.l.b16 %v37
    %v85 = vunpack.c.h.b16 %v37
    %v86 = vunpack.c.l.b16 %v38
    %v87 = vunpack.c.h.b16 %v38
    %v88 = vunpack.c.l.b16 %v39
    %v89 = vunpack.c.h.b16 %v39
    %v90 = vunpack.c.l.b16 %v40
    %v91 = vunpack.c.h.b16 %v40
    %v92 = vunpack.c.l.b16 %v41
    %v93 = vunpack.c.h.b16 %v41
    %v94 = vunpack.c.l.b16 %v42
    %v95 = vunpack.c.h.b16 %v42
    %v96 = vunpack.c.l.b16 %v43
    %v97 = vunpack.c.h.b16 %v43
    %v98 = vunpack.c.l.b16 %v44
    %v99 = vunpack.c.h.b16 %v44
    %v100 = vunpack.c.l.b16 %v45
    %v101 = vunpack.c.h.b16 %v45
    %v102 = vunpack.c.l.b16 %v46
    %v103 = vunpack.c.h.b16 %v46
    %v104 = vunpack.c.l.b16 %v47
    %v105 = vunpack.c.h.b16 %v47
    %v106 = vunpack.c.l.b16 %v48
    %v107 = vunpack.c.h.b16 %v48
    %v108 = vunpack.c.l.b16 %v49
    %v109 = vunpack.c.h.b16 %v49
    %v110 = vpack.c.b16 %v80, %v78
    %v111 = vpack.c.b16 %v81, %v79
    %v112 = vpack.c.b16 %v84, %v82
    %v113 = vpack.c.b16 %v85, %v83
    %v114 = vpack.c.b16 %v88, %v86
    %v115 = vpack.c.b16 %v89, %v87
    %v116 = vpack.c.b16 %v92, %v90
    %v117 = vpack.c.b16 %v93, %v91
    %v118 = vpack.c.b16 %v96, %v94
    %v119 = vpack.c.b16 %v97, %v95
    %v120 = vpack.c.b16 %v100, %v98
    %v121 = vpack.c.b16 %v101, %v99
    %v122 = vpack.c.b16 %v104, %v102
    %v123 = vpack.c.b16 %v105, %v103
    %v124 = vpack.c.b16 %v108, %v106
    %v125 = vpack.c.b16 %v109, %v107
    %142 = vmatprep.subr.bf16.mxu0 %v125
    %143 = vmatpush1.bf16.msra.mxu0 %v124
    %144 = vmatprep.subr.bf16.mxu0 %v123
    %145 = vmatpush1.bf16.msra.mxu0 %v122
    %146 = vmatprep.subr.bf16.mxu0 %v121
    %147 = vmatpush1.bf16.msra.mxu0 %v120
    %148 = vmatprep.subr.bf16.mxu0 %v119
    %149 = vmatpush1.bf16.msra.mxu0 %v118
    %150 = vmatprep.subr.bf16.mxu0 %v117
    %151 = vmatpush1.bf16.msra.mxu0 %v116
    %152 = vmatprep.subr.bf16.mxu0 %v115
    %153 = vmatpush1.bf16.msra.mxu0 %v114
    %154 = vmatprep.subr.bf16.mxu0 %v113
    %155 = vmatpush1.bf16.msra.mxu0 %v112
    %156 = vmatprep.subr.bf16.mxu0 %v111
    %157 = vmatpush1.bf16.msra.mxu0 %v110
    %158 = vmatprep.subr.bf16.mxu0 0
    %159 = vmatpush2.bf16.msra.mxu0 0
    %160 = vmatprep.subr.bf16.mxu0 0
    %161 = vmatpush2.bf16.msra.mxu0 0
    %162 = vmatprep.subr.bf16.mxu0 0
    %163 = vmatpush2.bf16.msra.mxu0 0
    %164 = vmatprep.subr.bf16.mxu0 0
    %165 = vmatpush2.bf16.msra.mxu0 0
    %166 = vmatprep.subr.bf16.mxu0 0
    %167 = vmatpush2.bf16.msra.mxu0 0
    %168 = vmatprep.subr.bf16.mxu0 0
    %169 = vmatpush2.bf16.msra.mxu0 0
    %170 = vmatprep.subr.bf16.mxu0 0
    %171 = vmatpush2.bf16.msra.mxu0 0
    %172 = vmatprep.subr.bf16.mxu0 0
    %173 = vmatpush2.bf16.msra.mxu0 0
    %174 = vmatprep.mubr.bf16.mxu0 0
    %175 = vmatmul.mubr.bf16.gmra.mxu0 %v33
    %v176 = vpop.f32.mrf.mxu0
    %v177 = vadd.f32 %v55, %v176
    %v178 = vpop.f32.mrf.mxu0
    %v179 = vadd.f32 %v59, %v178
    %v180 = vpop.f32.mrf.mxu0
    %v181 = vpop.f32.mrf.mxu0
    %182 = vdwg.mxu0
    %v183 = vmax.f32 %v177, 0.0
    %v184 = vmax.f32 %v179, 0.0
    %v185 = vpack.c.bf16 %v183, %v183
    %v186 = vpack.c.bf16 %v184, %v184
    %v187 = vld [vmem:[#allocation2 + $0x80] sm:$0xff]
    %v188 = vld [vmem:[#allocation2 + $0x88] sm:$0xff]
    %v189 = vld [vmem:[#allocation2 + $0x90] sm:$0xff]
    %v190 = vld [vmem:[#allocation2 + $0x98] sm:$0xff]
    %v191 = vld [vmem:[#allocation2 + $0xa0] sm:$0xff]
    %v192 = vld [vmem:[#allocation2 + $0xa8] sm:$0xff]
    %v193 = vld [vmem:[#allocation2 + $0xb0] sm:$0xff]
    %v194 = vld [vmem:[#allocation2 + $0xb8] sm:$0xff]
    %v195 = vld [vmem:[#allocation2 + $0xc0] sm:$0xff]
    %v196 = vld [vmem:[#allocation2 + $0xc8] sm:$0xff]
    %v197 = vld [vmem:[#allocation2 + $0xd0] sm:$0xff]
    %v198 = vld [vmem:[#allocation2 + $0xd8] sm:$0xff]
    %v199 = vld [vmem:[#allocation2 + $0xe0] sm:$0xff]
    %v200 = vld [vmem:[#allocation2 + $0xe8] sm:$0xff]
    %v201 = vld [vmem:[#allocation2 + $0xf0] sm:$0xff]
    %v202 = vld [vmem:[#allocation2 + $0xf8] sm:$0xff]
    %v203 = vld [vmem:[#allocation2 + $0x100] sm:$0xff]
    %v204 = vld [vmem:[#allocation2 + $0x108] sm:$0xff]
    %v205 = vld [vmem:[#allocation2 + $0x110] sm:$0xff]
    %v206 = vld [vmem:[#allocation2 + $0x118] sm:$0xff]
    %v207 = vld [vmem:[#allocation2 + $0x120] sm:$0xff]
    %v208 = vld [vmem:[#allocation2 + $0x128] sm:$0xff]
    %v209 = vld [vmem:[#allocation2 + $0x130] sm:$0xff]
    %v210 = vld [vmem:[#allocation2 + $0x138] sm:$0xff]
    %v211 = vld [vmem:[#allocation2 + $0x140] sm:$0xff]
    %v212 = vld [vmem:[#allocation2 + $0x148] sm:$0xff]
    %v213 = vld [vmem:[#allocation2 + $0x150] sm:$0xff]
    %v214 = vld [vmem:[#allocation2 + $0x158] sm:$0xff]
    %v215 = vld [vmem:[#allocation2 + $0x160] sm:$0xff]
    %v216 = vld [vmem:[#allocation2 + $0x168] sm:$0xff]
    %v217 = vld [vmem:[#allocation2 + $0x170] sm:$0xff]
    %v218 = vld [vmem:[#allocation2 + $0x178] sm:$0xff]
    %s219 = scalar_lea.vmem %s3, 1
    %v220 = vld [vmem:[%s219] ss:$8 sm:$0x3]
    %v222 = vlaneseq
    %v223 = vshrl.u32 %v222, 7
    %v224 = vsub.s32 0, %v223
    %v225 = vrot.slane %v220, %v224
    %v226 = vlaneseq
    %v227 = vshrl.u32 %v226, 7
    %v228 = vsub.s32 1, %v227
    %v229 = vrot.slane %v220, %v228
    %v264 = vunpack.c.l.b16 %v187
    %v265 = vunpack.c.h.b16 %v187
    %v266 = vunpack.c.l.b16 %v188
    %v267 = vunpack.c.h.b16 %v188
    %v268 = vunpack.c.l.b16 %v189
    %v269 = vunpack.c.h.b16 %v189
    %v270 = vunpack.c.l.b16 %v190
    %v271 = vunpack.c.h.b16 %v190
    %v272 = vunpack.c.l.b16 %v191
    %v273 = vunpack.c.h.b16 %v191
    %v274 = vunpack.c.l.b16 %v192
    %v275 = vunpack.c.h.b16 %v192
    %v276 = vunpack.c.l.b16 %v193
    %v277 = vunpack.c.h.b16 %v193
    %v278 = vunpack.c.l.b16 %v194
    %v279 = vunpack.c.h.b16 %v194
    %v280 = vunpack.c.l.b16 %v195
    %v281 = vunpack.c.h.b16 %v195
    %v282 = vunpack.c.l.b16 %v196
    %v283 = vunpack.c.h.b16 %v196
    %v284 = vunpack.c.l.b16 %v197
    %v285 = vunpack.c.h.b16 %v197
    %v286 = vunpack.c.l.b16 %v198
    %v287 = vunpack.c.h.b16 %v198
    %v288 = vunpack.c.l.b16 %v199
    %v289 = vunpack.c.h.b16 %v199
    %v290 = vunpack.c.l.b16 %v200
    %v291 = vunpack.c.h.b16 %v200
    %v292 = vunpack.c.l.b16 %v201
    %v293 = vunpack.c.h.b16 %v201
    %v294 = vunpack.c.l.b16 %v202
    %v295 = vunpack.c.h.b16 %v202
    %v296 = vunpack.c.l.b16 %v203
    %v297 = vunpack.c.h.b16 %v203
    %v298 = vunpack.c.l.b16 %v204
    %v299 = vunpack.c.h.b16 %v204
    %v300 = vunpack.c.l.b16 %v205
    %v301 = vunpack.c.h.b16 %v205
    %v302 = vunpack.c.l.b16 %v206
    %v303 = vunpack.c.h.b16 %v206
    %v304 = vunpack.c.l.b16 %v207
    %v305 = vunpack.c.h.b16 %v207
    %v306 = vunpack.c.l.b16 %v208
    %v307 = vunpack.c.h.b16 %v208
    %v308 = vunpack.c.l.b16 %v209
    %v309 = vunpack.c.h.b16 %v209
    %v310 = vunpack.c.l.b16 %v210
    %v311 = vunpack.c.h.b16 %v210
    %v312 = vunpack.c.l.b16 %v211
    %v313 = vunpack.c.h.b16 %v211
    %v314 = vunpack.c.l.b16 %v212
    %v315 = vunpack.c.h.b16 %v212
    %v316 = vunpack.c.l.b16 %v213
    %v317 = vunpack.c.h.b16 %v213
    %v318 = vunpack.c.l.b16 %v214
    %v319 = vunpack.c.h.b16 %v214
    %v320 = vunpack.c.l.b16 %v215
    %v321 = vunpack.c.h.b16 %v215
    %v322 = vunpack.c.l.b16 %v216
    %v323 = vunpack.c.h.b16 %v216
    %v324 = vunpack.c.l.b16 %v217
    %v325 = vunpack.c.h.b16 %v217
    %v326 = vunpack.c.l.b16 %v218
    %v327 = vunpack.c.h.b16 %v218
    %v328 = vpack.c.b16 %v266, %v264
    %v329 = vpack.c.b16 %v267, %v265
    %v330 = vpack.c.b16 %v270, %v268
    %v331 = vpack.c.b16 %v271, %v269
    %v332 = vpack.c.b16 %v274, %v272
    %v333 = vpack.c.b16 %v275, %v273
    %v334 = vpack.c.b16 %v278, %v276
    %v335 = vpack.c.b16 %v279, %v277
    %v336 = vpack.c.b16 %v282, %v280
    %v337 = vpack.c.b16 %v283, %v281
    %v338 = vpack.c.b16 %v286, %v284
    %v339 = vpack.c.b16 %v287, %v285
    %v340 = vpack.c.b16 %v290, %v288
    %v341 = vpack.c.b16 %v291, %v289
    %v342 = vpack.c.b16 %v294, %v292
    %v343 = vpack.c.b16 %v295, %v293
    %v344 = vpack.c.b16 %v298, %v296
    %v345 = vpack.c.b16 %v299, %v297
    %v346 = vpack.c.b16 %v302, %v300
    %v347 = vpack.c.b16 %v303, %v301
    %v348 = vpack.c.b16 %v306, %v304
    %v349 = vpack.c.b16 %v307, %v305
    %v350 = vpack.c.b16 %v310, %v308
    %v351 = vpack.c.b16 %v311, %v309
    %v352 = vpack.c.b16 %v314, %v312
    %v353 = vpack.c.b16 %v315, %v313
    %v354 = vpack.c.b16 %v318, %v316
    %v355 = vpack.c.b16 %v319, %v317
    %v356 = vpack.c.b16 %v322, %v320
    %v357 = vpack.c.b16 %v323, %v321
    %v358 = vpack.c.b16 %v326, %v324
    %v359 = vpack.c.b16 %v327, %v325
    %392 = vmatprep.subr.bf16.mxu0 %v343
    %393 = vmatpush1.bf16.msra.mxu0 %v342
    %394 = vmatprep.subr.bf16.mxu0 %v341
    %395 = vmatpush1.bf16.msra.mxu0 %v340
    %396 = vmatprep.subr.bf16.mxu0 %v339
    %397 = vmatpush1.bf16.msra.mxu0 %v338
    %398 = vmatprep.subr.bf16.mxu0 %v337
    %399 = vmatpush1.bf16.msra.mxu0 %v336
    %400 = vmatprep.subr.bf16.mxu0 %v335
    %401 = vmatpush1.bf16.msra.mxu0 %v334
    %402 = vmatprep.subr.bf16.mxu0 %v333
    %403 = vmatpush1.bf16.msra.mxu0 %v332
    %404 = vmatprep.subr.bf16.mxu0 %v331
    %405 = vmatpush1.bf16.msra.mxu0 %v330
    %406 = vmatprep.subr.bf16.mxu0 %v329
    %407 = vmatpush1.bf16.msra.mxu0 %v328
    %408 = vmatprep.subr.bf16.mxu0 %v359
    %409 = vmatpush2.bf16.msra.mxu0 %v358
    %410 = vmatprep.subr.bf16.mxu0 %v357
    %411 = vmatpush2.bf16.msra.mxu0 %v356
    %412 = vmatprep.subr.bf16.mxu0 %v355
    %413 = vmatpush2.bf16.msra.mxu0 %v354
    %414 = vmatprep.subr.bf16.mxu0 %v353
    %415 = vmatpush2.bf16.msra.mxu0 %v352
    %416 = vmatprep.subr.bf16.mxu0 %v351
    %417 = vmatpush2.bf16.msra.mxu0 %v350
    %418 = vmatprep.subr.bf16.mxu0 %v349
    %419 = vmatpush2.bf16.msra.mxu0 %v348
    %420 = vmatprep.subr.bf16.mxu0 %v347
    %421 = vmatpush2.bf16.msra.mxu0 %v346
    %422 = vmatprep.subr.bf16.mxu0 %v345
    %423 = vmatpush2.bf16.msra.mxu0 %v344
    %424 = vmatprep.mubr.bf16.mxu0 %v186
    %425 = vmatmul.mubr.bf16.gmra.mxu0 %v185
    %v426 = vpop.f32.mrf.mxu0
    %v427 = vadd.f32 %v225, %v426
    %v428 = vpop.f32.mrf.mxu0
    %v429 = vadd.f32 %v229, %v428
    %v430 = vpop.f32.mrf.mxu0
    %v431 = vpop.f32.mrf.mxu0
    %432 = vdwg.mxu0
    %v433 = vmax.f32 %v427, 0.0
    %v434 = vmax.f32 %v429, 0.0
    %v435 = vpack.c.bf16 %v433, %v433
    %v436 = vpack.c.bf16 %v434, %v434
    %v437 = vld [vmem:[#allocation2 + $0x180] sm:$0xf]
    %v438 = vld [vmem:[#allocation2 + $0x188] sm:$0xf]
    %v439 = vld [vmem:[#allocation2 + $0x190] sm:$0xf]
    %v440 = vld [vmem:[#allocation2 + $0x198] sm:$0xf]
    %v441 = vld [vmem:[#allocation2 + $0x1a0] sm:$0xf]
    %v442 = vld [vmem:[#allocation2 + $0x1a8] sm:$0xf]
    %v443 = vld [vmem:[#allocation2 + $0x1b0] sm:$0xf]
    %v444 = vld [vmem:[#allocation2 + $0x1b8] sm:$0xf]
    %v445 = vld [vmem:[#allocation2 + $0x1c0] sm:$0xf]
    %v446 = vld [vmem:[#allocation2 + $0x1c8] sm:$0xf]
    %v447 = vld [vmem:[#allocation2 + $0x1d0] sm:$0xf]
    %v448 = vld [vmem:[#allocation2 + $0x1d8] sm:$0xf]
    %v449 = vld [vmem:[#allocation2 + $0x1e0] sm:$0xf]
    %v450 = vld [vmem:[#allocation2 + $0x1e8] sm:$0xf]
    %v451 = vld [vmem:[#allocation2 + $0x1f0] sm:$0xf]
    %v452 = vld [vmem:[#allocation2 + $0x1f8] sm:$0xf]
    %v453 = vld [vmem:[#allocation2 + $0x200] sm:$0xf]
    %v454 = vld [vmem:[#allocation2 + $0x208] sm:$0xf]
    %v455 = vld [vmem:[#allocation2 + $0x210] sm:$0xf]
    %v456 = vld [vmem:[#allocation2 + $0x218] sm:$0xf]
    %v457 = vld [vmem:[#allocation2 + $0x220] sm:$0xf]
    %v458 = vld [vmem:[#allocation2 + $0x228] sm:$0xf]
    %v459 = vld [vmem:[#allocation2 + $0x230] sm:$0xf]
    %v460 = vld [vmem:[#allocation2 + $0x238] sm:$0xf]
    %v461 = vld [vmem:[#allocation2 + $0x240] sm:$0xf]
    %v462 = vld [vmem:[#allocation2 + $0x248] sm:$0xf]
    %v463 = vld [vmem:[#allocation2 + $0x250] sm:$0xf]
    %v464 = vld [vmem:[#allocation2 + $0x258] sm:$0xf]
    %v465 = vld [vmem:[#allocation2 + $0x260] sm:$0xf]
    %v466 = vld [vmem:[#allocation2 + $0x268] sm:$0xf]
    %v467 = vld [vmem:[#allocation2 + $0x270] sm:$0xf]
    %v468 = vld [vmem:[#allocation2 + $0x278] sm:$0xf]
    %v469 = vld [vmem:[%s3 + $0x2] ss:$0 sm:$0xff]
    %v502 = vunpack.c.l.b16 %v437
    %v503 = vunpack.c.l.b16 %v438
    %v504 = vunpack.c.l.b16 %v439
    %v505 = vunpack.c.l.b16 %v440
    %v506 = vunpack.c.l.b16 %v441
    %v507 = vunpack.c.l.b16 %v442
    %v508 = vunpack.c.l.b16 %v443
    %v509 = vunpack.c.l.b16 %v444
    %v510 = vunpack.c.l.b16 %v445
    %v511 = vunpack.c.l.b16 %v446
    %v512 = vunpack.c.l.b16 %v447
    %v513 = vunpack.c.l.b16 %v448
    %v514 = vunpack.c.l.b16 %v449
    %v515 = vunpack.c.l.b16 %v450
    %v516 = vunpack.c.l.b16 %v451
    %v517 = vunpack.c.l.b16 %v452
    %v518 = vunpack.c.l.b16 %v453
    %v519 = vunpack.c.l.b16 %v454
    %v520 = vunpack.c.l.b16 %v455
    %v521 = vunpack.c.l.b16 %v456
    %v522 = vunpack.c.l.b16 %v457
    %v523 = vunpack.c.l.b16 %v458
    %v524 = vunpack.c.l.b16 %v459
    %v525 = vunpack.c.l.b16 %v460
    %v526 = vunpack.c.l.b16 %v461
    %v527 = vunpack.c.l.b16 %v462
    %v528 = vunpack.c.l.b16 %v463
    %v529 = vunpack.c.l.b16 %v464
    %v530 = vunpack.c.l.b16 %v465
    %v531 = vunpack.c.l.b16 %v466
    %v532 = vunpack.c.l.b16 %v467
    %v533 = vunpack.c.l.b16 %v468
    %v534 = vpack.c.b16 %v503, %v502
    %v535 = vpack.c.b16 %v505, %v504
    %v536 = vpack.c.b16 %v507, %v506
    %v537 = vpack.c.b16 %v509, %v508
    %v538 = vpack.c.b16 %v511, %v510
    %v539 = vpack.c.b16 %v513, %v512
    %v540 = vpack.c.b16 %v515, %v514
    %v541 = vpack.c.b16 %v517, %v516
    %v542 = vpack.c.b16 %v519, %v518
    %v543 = vpack.c.b16 %v521, %v520
    %v544 = vpack.c.b16 %v523, %v522
    %v545 = vpack.c.b16 %v525, %v524
    %v546 = vpack.c.b16 %v527, %v526
    %v547 = vpack.c.b16 %v529, %v528
    %v548 = vpack.c.b16 %v531, %v530
    %v549 = vpack.c.b16 %v533, %v532
    %566 = vmatprep.subr.bf16.mxu0 0
    %567 = vmatpush1.bf16.msra.mxu0 %v541
    %568 = vmatprep.subr.bf16.mxu0 0
    %569 = vmatpush1.bf16.msra.mxu0 %v540
    %570 = vmatprep.subr.bf16.mxu0 0
    %571 = vmatpush1.bf16.msra.mxu0 %v539
    %572 = vmatprep.subr.bf16.mxu0 0
    %573 = vmatpush1.bf16.msra.mxu0 %v538
    %574 = vmatprep.subr.bf16.mxu0 0
    %575 = vmatpush1.bf16.msra.mxu0 %v537
    %576 = vmatprep.subr.bf16.mxu0 0
    %577 = vmatpush1.bf16.msra.mxu0 %v536
    %578 = vmatprep.subr.bf16.mxu0 0
    %579 = vmatpush1.bf16.msra.mxu0 %v535
    %580 = vmatprep.subr.bf16.mxu0 0
    %581 = vmatpush1.bf16.msra.mxu0 %v534
    %582 = vmatprep.subr.bf16.mxu0 0
    %583 = vmatpush2.bf16.msra.mxu0 %v549
    %584 = vmatprep.subr.bf16.mxu0 0
    %585 = vmatpush2.bf16.msra.mxu0 %v548
    %586 = vmatprep.subr.bf16.mxu0 0
    %587 = vmatpush2.bf16.msra.mxu0 %v547
    %588 = vmatprep.subr.bf16.mxu0 0
    %589 = vmatpush2.bf16.msra.mxu0 %v546
    %590 = vmatprep.subr.bf16.mxu0 0
    %591 = vmatpush2.bf16.msra.mxu0 %v545
    %592 = vmatprep.subr.bf16.mxu0 0
    %593 = vmatpush2.bf16.msra.mxu0 %v544
    %594 = vmatprep.subr.bf16.mxu0 0
    %595 = vmatpush2.bf16.msra.mxu0 %v543
    %596 = vmatprep.subr.bf16.mxu0 0
    %597 = vmatpush2.bf16.msra.mxu0 %v542
    %598 = vmatprep.mubr.bf16.mxu0 %v436
    %599 = vmatmul.mubr.bf16.gmra.mxu0 %v435
    %v600 = vpop.f32.mrf.mxu0
    %v601 = vadd.f32 %v469, %v600
    %v602 = vpop.f32.mrf.mxu0
    %v603 = vpop.f32.mrf.mxu0
    %v604 = vpop.f32.mrf.mxu0
    %605 = vdwg.mxu0
    %v606 = vmax.f32 %v601, 0.0
    %v607 = vpack.c.bf16 %v606, %v606
    %v608 = vld [vmem:[#allocation2 + $0x280] sm:$0xf]
    %v609 = vld [vmem:[#allocation2 + $0x288] sm:$0xf]
    %v610 = vld [vmem:[#allocation2 + $0x290] sm:$0xf]
    %v611 = vld [vmem:[#allocation2 + $0x298] sm:$0xf]
    %v612 = vld [vmem:[#allocation2 + $0x2a0] sm:$0xf]
    %v613 = vld [vmem:[#allocation2 + $0x2a8] sm:$0xf]
    %v614 = vld [vmem:[#allocation2 + $0x2b0] sm:$0xf]
    %v615 = vld [vmem:[#allocation2 + $0x2b8] sm:$0xf]
    %v616 = vld [vmem:[#allocation2 + $0x2c0] sm:$0xf]
    %v617 = vld [vmem:[#allocation2 + $0x2c8] sm:$0xf]
    %v618 = vld [vmem:[#allocation2 + $0x2d0] sm:$0xf]
    %v619 = vld [vmem:[#allocation2 + $0x2d8] sm:$0xf]
    %v620 = vld [vmem:[#allocation2 + $0x2e0] sm:$0xf]
    %v621 = vld [vmem:[#allocation2 + $0x2e8] sm:$0xf]
    %v622 = vld [vmem:[#allocation2 + $0x2f0] sm:$0xf]
    %v623 = vld [vmem:[#allocation2 + $0x2f8] sm:$0xf]
    %v624 = vld [vmem:[%s3 + $0x3] ss:$0 sm:$0xff]
    %v641 = vunpack.c.l.b16 %v608
    %v642 = vunpack.c.l.b16 %v609
    %v643 = vunpack.c.l.b16 %v610
    %v644 = vunpack.c.l.b16 %v611
    %v645 = vunpack.c.l.b16 %v612
    %v646 = vunpack.c.l.b16 %v613
    %v647 = vunpack.c.l.b16 %v614
    %v648 = vunpack.c.l.b16 %v615
    %v649 = vunpack.c.l.b16 %v616
    %v650 = vunpack.c.l.b16 %v617
    %v651 = vunpack.c.l.b16 %v618
    %v652 = vunpack.c.l.b16 %v619
    %v653 = vunpack.c.l.b16 %v620
    %v654 = vunpack.c.l.b16 %v621
    %v655 = vunpack.c.l.b16 %v622
    %v656 = vunpack.c.l.b16 %v623
    %v657 = vpack.c.b16 %v642, %v641
    %v658 = vpack.c.b16 %v644, %v643
    %v659 = vpack.c.b16 %v646, %v645
    %v660 = vpack.c.b16 %v648, %v647
    %v661 = vpack.c.b16 %v650, %v649
    %v662 = vpack.c.b16 %v652, %v651
    %v663 = vpack.c.b16 %v654, %v653
    %v664 = vpack.c.b16 %v656, %v655
    %673 = vmatprep.subr.bf16.mxu0 0
    %674 = vmatpush1.bf16.msra.mxu0 %v664
    %675 = vmatprep.subr.bf16.mxu0 0
    %676 = vmatpush1.bf16.msra.mxu0 %v663
    %677 = vmatprep.subr.bf16.mxu0 0
    %678 = vmatpush1.bf16.msra.mxu0 %v662
    %679 = vmatprep.subr.bf16.mxu0 0
    %680 = vmatpush1.bf16.msra.mxu0 %v661
    %681 = vmatprep.subr.bf16.mxu0 0
    %682 = vmatpush1.bf16.msra.mxu0 %v660
    %683 = vmatprep.subr.bf16.mxu0 0
    %684 = vmatpush1.bf16.msra.mxu0 %v659
    %685 = vmatprep.subr.bf16.mxu0 0
    %686 = vmatpush1.bf16.msra.mxu0 %v658
    %687 = vmatprep.subr.bf16.mxu0 0
    %688 = vmatpush1.bf16.msra.mxu0 %v657
    %689 = vmatprep.subr.bf16.mxu0 0
    %690 = vmatpush2.bf16.msra.mxu0 0
    %691 = vmatprep.subr.bf16.mxu0 0
    %692 = vmatpush2.bf16.msra.mxu0 0
    %693 = vmatprep.subr.bf16.mxu0 0
    %694 = vmatpush2.bf16.msra.mxu0 0
    %695 = vmatprep.subr.bf16.mxu0 0
    %696 = vmatpush2.bf16.msra.mxu0 0
    %697 = vmatprep.subr.bf16.mxu0 0
    %698 = vmatpush2.bf16.msra.mxu0 0
    %699 = vmatprep.subr.bf16.mxu0 0
    %700 = vmatpush2.bf16.msra.mxu0 0
    %701 = vmatprep.subr.bf16.mxu0 0
    %702 = vmatpush2.bf16.msra.mxu0 0
    %703 = vmatprep.subr.bf16.mxu0 0
    %704 = vmatpush2.bf16.msra.mxu0 0
    %705 = vmatprep.mubr.bf16.mxu0 0
    %706 = vmatmul.mubr.bf16.gmra.mxu0 %v607
    %v707 = vpop.f32.mrf.mxu0
    %v708 = vadd.f32 %v624, %v707
    %v709 = vpop.f32.mrf.mxu0
    %v710 = vpop.f32.mrf.mxu0
    %v711 = vpop.f32.mrf.mxu0
    %712 = vdwg.mxu0
    %v713 = vmax.f32 %v708, 0.0
    %v714 = vpack.c.bf16 %v713, %v713
    %v715 = vld [vmem:[%s1] sm:$0xf]
    %v716 = vld [vmem:[#allocation2 + $0x300] sm:$0xf]
    %v717 = vld [vmem:[#allocation2 + $0x308] sm:$0xf]
    %v718 = vld [vmem:[#allocation2 + $0x310] sm:$0xf]
    %v719 = vld [vmem:[#allocation2 + $0x318] sm:$0xf]
    %v720 = vld [vmem:[#allocation2 + $0x320] sm:$0xf]
    %v721 = vld [vmem:[#allocation2 + $0x328] sm:$0xf]
    %v722 = vld [vmem:[#allocation2 + $0x330] sm:$0xf]
    %v723 = vld [vmem:[#allocation2 + $0x338] sm:$0xf]
    %v724 = vld [vmem:[#allocation2 + $0x340] sm:$0xf]
    %v725 = vld [vmem:[#allocation2 + $0x348] sm:$0xf]
    %v726 = vld [vmem:[#allocation2 + $0x350] sm:$0xf]
    %v727 = vld [vmem:[#allocation2 + $0x358] sm:$0xf]
    %v728 = vld [vmem:[#allocation2 + $0x360] sm:$0xf]
    %v729 = vld [vmem:[#allocation2 + $0x368] sm:$0xf]
    %v730 = vld [vmem:[#allocation2 + $0x370] sm:$0xf]
    %v731 = vld [vmem:[#allocation2 + $0x378] sm:$0xf]
    %v732 = vld [vmem:[%s3 + $0x4] ss:$0 sm:$0xff]
    %v749 = vunpack.c.l.b16 %v716
    %v750 = vunpack.c.l.b16 %v717
    %v751 = vunpack.c.l.b16 %v718
    %v752 = vunpack.c.l.b16 %v719
    %v753 = vunpack.c.l.b16 %v720
    %v754 = vunpack.c.l.b16 %v721
    %v755 = vunpack.c.l.b16 %v722
    %v756 = vunpack.c.l.b16 %v723
    %v757 = vunpack.c.l.b16 %v724
    %v758 = vunpack.c.l.b16 %v725
    %v759 = vunpack.c.l.b16 %v726
    %v760 = vunpack.c.l.b16 %v727
    %v761 = vunpack.c.l.b16 %v728
    %v762 = vunpack.c.l.b16 %v729
    %v763 = vunpack.c.l.b16 %v730
    %v764 = vunpack.c.l.b16 %v731
    %v765 = vpack.c.b16 %v750, %v749
    %v766 = vpack.c.b16 %v752, %v751
    %v767 = vpack.c.b16 %v754, %v753
    %v768 = vpack.c.b16 %v756, %v755
    %v769 = vpack.c.b16 %v758, %v757
    %v770 = vpack.c.b16 %v760, %v759
    %v771 = vpack.c.b16 %v762, %v761
    %v772 = vpack.c.b16 %v764, %v763
    %781 = vmatprep.subr.bf16.mxu0 0
    %782 = vmatpush1.bf16.msra.mxu0 %v772
    %783 = vmatprep.subr.bf16.mxu0 0
    %784 = vmatpush1.bf16.msra.mxu0 %v771
    %785 = vmatprep.subr.bf16.mxu0 0
    %786 = vmatpush1.bf16.msra.mxu0 %v770
    %787 = vmatprep.subr.bf16.mxu0 0
    %788 = vmatpush1.bf16.msra.mxu0 %v769
    %789 = vmatprep.subr.bf16.mxu0 0
    %790 = vmatpush1.bf16.msra.mxu0 %v768
    %791 = vmatprep.subr.bf16.mxu0 0
    %792 = vmatpush1.bf16.msra.mxu0 %v767
    %793 = vmatprep.subr.bf16.mxu0 0
    %794 = vmatpush1.bf16.msra.mxu0 %v766
    %795 = vmatprep.subr.bf16.mxu0 0
    %796 = vmatpush1.bf16.msra.mxu0 %v765
    %797 = vmatprep.subr.bf16.mxu0 0
    %798 = vmatpush2.bf16.msra.mxu0 0
    %799 = vmatprep.subr.bf16.mxu0 0
    %800 = vmatpush2.bf16.msra.mxu0 0
    %801 = vmatprep.subr.bf16.mxu0 0
    %802 = vmatpush2.bf16.msra.mxu0 0
    %803 = vmatprep.subr.bf16.mxu0 0
    %804 = vmatpush2.bf16.msra.mxu0 0
    %805 = vmatprep.subr.bf16.mxu0 0
    %806 = vmatpush2.bf16.msra.mxu0 0
    %807 = vmatprep.subr.bf16.mxu0 0
    %808 = vmatpush2.bf16.msra.mxu0 0
    %809 = vmatprep.subr.bf16.mxu0 0
    %810 = vmatpush2.bf16.msra.mxu0 0
    %811 = vmatprep.subr.bf16.mxu0 0
    %812 = vmatpush2.bf16.msra.mxu0 0
    %813 = vmatprep.mubr.bf16.mxu0 0
    %814 = vmatmul.mubr.bf16.gmra.mxu0 %v715
    %v815 = vpop.f32.mrf.mxu0
    %v816 = vadd.f32 %v732, %v815
    %v817 = vpop.f32.mrf.mxu0
    %v818 = vpop.f32.mrf.mxu0
    %v819 = vpop.f32.mrf.mxu0
    %820 = vdwg.mxu0
    %v821 = vmax.f32 %v816, 0.0
    %v822 = vpack.c.bf16 %v821, %v821
    %v823 = vld [vmem:[#allocation2 + $0x380] sm:$0xf]
    %v824 = vld [vmem:[#allocation2 + $0x388] sm:$0xf]
    %v825 = vld [vmem:[#allocation2 + $0x390] sm:$0xf]
    %v826 = vld [vmem:[#allocation2 + $0x398] sm:$0xf]
    %v827 = vld [vmem:[#allocation2 + $0x3a0] sm:$0xf]
    %v828 = vld [vmem:[#allocation2 + $0x3a8] sm:$0xf]
    %v829 = vld [vmem:[#allocation2 + $0x3b0] sm:$0xf]
    %v830 = vld [vmem:[#allocation2 + $0x3b8] sm:$0xf]
    %v831 = vld [vmem:[#allocation2 + $0x3c0] sm:$0xf]
    %v832 = vld [vmem:[#allocation2 + $0x3c8] sm:$0xf]
    %v833 = vld [vmem:[#allocation2 + $0x3d0] sm:$0xf]
    %v834 = vld [vmem:[#allocation2 + $0x3d8] sm:$0xf]
    %v835 = vld [vmem:[#allocation2 + $0x3e0] sm:$0xf]
    %v836 = vld [vmem:[#allocation2 + $0x3e8] sm:$0xf]
    %v837 = vld [vmem:[#allocation2 + $0x3f0] sm:$0xf]
    %v838 = vld [vmem:[#allocation2 + $0x3f8] sm:$0xf]
    %v839 = vld [vmem:[%s3 + $0x5] ss:$0 sm:$0xff]
    %v856 = vunpack.c.l.b16 %v823
    %v857 = vunpack.c.l.b16 %v824
    %v858 = vunpack.c.l.b16 %v825
    %v859 = vunpack.c.l.b16 %v826
    %v860 = vunpack.c.l.b16 %v827
    %v861 = vunpack.c.l.b16 %v828
    %v862 = vunpack.c.l.b16 %v829
    %v863 = vunpack.c.l.b16 %v830
    %v864 = vunpack.c.l.b16 %v831
    %v865 = vunpack.c.l.b16 %v832
    %v866 = vunpack.c.l.b16 %v833
    %v867 = vunpack.c.l.b16 %v834
    %v868 = vunpack.c.l.b16 %v835
    %v869 = vunpack.c.l.b16 %v836
    %v870 = vunpack.c.l.b16 %v837
    %v871 = vunpack.c.l.b16 %v838
    %v872 = vpack.c.b16 %v857, %v856
    %v873 = vpack.c.b16 %v859, %v858
    %v874 = vpack.c.b16 %v861, %v860
    %v875 = vpack.c.b16 %v863, %v862
    %v876 = vpack.c.b16 %v865, %v864
    %v877 = vpack.c.b16 %v867, %v866
    %v878 = vpack.c.b16 %v869, %v868
    %v879 = vpack.c.b16 %v871, %v870
    %888 = vmatprep.subr.bf16.mxu0 0
    %889 = vmatpush1.bf16.msra.mxu0 %v879
    %890 = vmatprep.subr.bf16.mxu0 0
    %891 = vmatpush1.bf16.msra.mxu0 %v878
    %892 = vmatprep.subr.bf16.mxu0 0
    %893 = vmatpush1.bf16.msra.mxu0 %v877
    %894 = vmatprep.subr.bf16.mxu0 0
    %895 = vmatpush1.bf16.msra.mxu0 %v876
    %896 = vmatprep.subr.bf16.mxu0 0
    %897 = vmatpush1.bf16.msra.mxu0 %v875
    %898 = vmatprep.subr.bf16.mxu0 0
    %899 = vmatpush1.bf16.msra.mxu0 %v874
    %900 = vmatprep.subr.bf16.mxu0 0
    %901 = vmatpush1.bf16.msra.mxu0 %v873
    %902 = vmatprep.subr.bf16.mxu0 0
    %903 = vmatpush1.bf16.msra.mxu0 %v872
    %904 = vmatprep.subr.bf16.mxu0 0
    %905 = vmatpush2.bf16.msra.mxu0 0
    %906 = vmatprep.subr.bf16.mxu0 0
    %907 = vmatpush2.bf16.msra.mxu0 0
    %908 = vmatprep.subr.bf16.mxu0 0
    %909 = vmatpush2.bf16.msra.mxu0 0
    %910 = vmatprep.subr.bf16.mxu0 0
    %911 = vmatpush2.bf16.msra.mxu0 0
    %912 = vmatprep.subr.bf16.mxu0 0
    %913 = vmatpush2.bf16.msra.mxu0 0
    %914 = vmatprep.subr.bf16.mxu0 0
    %915 = vmatpush2.bf16.msra.mxu0 0
    %916 = vmatprep.subr.bf16.mxu0 0
    %917 = vmatpush2.bf16.msra.mxu0 0
    %918 = vmatprep.subr.bf16.mxu0 0
    %919 = vmatpush2.bf16.msra.mxu0 0
    %920 = vmatprep.mubr.bf16.mxu0 0
    %921 = vmatmul.mubr.bf16.gmra.mxu0 %v822
    %v922 = vpop.f32.mrf.mxu0
    %v923 = vadd.f32 %v839, %v922
    %v924 = vpop.f32.mrf.mxu0
    %v925 = vpop.f32.mrf.mxu0
    %v926 = vpop.f32.mrf.mxu0
    %927 = vdwg.mxu0
    %v928 = vmax.f32 %v923, 0.0
    %v929 = vpack.c.bf16 %v928, %v928
    %930 = vmatprep.subr.bf16.mxu0 0
    %931 = vmatpush1.bf16.xpose.msra.mxu0 0
    %932 = vmatprep.subr.bf16.mxu0 0
    %933 = vmatpush1.bf16.xpose.msra.mxu0 0
    %934 = vmatprep.subr.bf16.mxu0 0
    %935 = vmatpush1.bf16.xpose.msra.mxu0 0
    %936 = vmatprep.subr.bf16.mxu0 0
    %937 = vmatpush1.bf16.xpose.msra.mxu0 0
    %938 = vmatprep.subr.bf16.mxu0 0
    %939 = vmatpush1.bf16.xpose.msra.mxu0 0
    %940 = vmatprep.subr.bf16.mxu0 0
    %941 = vmatpush1.bf16.xpose.msra.mxu0 0
    %942 = vmatprep.subr.bf16.mxu0 0
    %943 = vmatpush1.bf16.xpose.msra.mxu0 0
    %944 = vmatprep.subr.bf16.mxu0 0
    %945 = vmatpush1.bf16.xpose.msra.mxu0 %v714
    %946 = vmatprep.subr.bf16.mxu0 0
    %947 = vmatpush2.bf16.xpose.msra.mxu0 0
    %948 = vmatprep.subr.bf16.mxu0 0
    %949 = vmatpush2.bf16.xpose.msra.mxu0 0
    %950 = vmatprep.subr.bf16.mxu0 0
    %951 = vmatpush2.bf16.xpose.msra.mxu0 0
    %952 = vmatprep.subr.bf16.mxu0 0
    %953 = vmatpush2.bf16.xpose.msra.mxu0 0
    %954 = vmatprep.subr.bf16.mxu0 0
    %955 = vmatpush2.bf16.xpose.msra.mxu0 0
    %956 = vmatprep.subr.bf16.mxu0 0
    %957 = vmatpush2.bf16.xpose.msra.mxu0 0
    %958 = vmatprep.subr.bf16.mxu0 0
    %959 = vmatpush2.bf16.xpose.msra.mxu0 0
    %960 = vmatprep.subr.bf16.mxu0 0
    %961 = vmatpush2.bf16.xpose.msra.mxu0 0
    %962 = vmatprep.mubr.bf16.mxu0 0
    %963 = vmatmul.mubr.bf16.gmra.mxu0 %v929
    %v964 = vpop.f32.mrf.mxu0
    %v965 = vadd.f32 0.0, %v964
    %v966 = vpop.f32.mrf.mxu0
    %v967 = vpop.f32.mrf.mxu0
    %v968 = vpop.f32.mrf.mxu0
    %969 = vdwg.mxu0
    %v970 = vxor.u32 %v965, 2147483648
    %v971 = vmul.f32 %v970, 1.442695
    %v972 = vpow.pop %v971
    %v973 = vadd.f32 %v972, 1.0
    %v974 = vrcp.pop %v973
    %v975 = vmul.f32 1.0, %v974
    %vm976 = vcmask 64512
    %977 = vst.msk [vmem:[#allocation5] sm:$0xff] %vm976, %v975
    // Predicated region
    $region22: #{_lambda_.1} parent=1 // pred_check
      _
    $region23: #{_lambda_.1} parent=1 // pred_check_branch
      %979 = sbr.rel (0) target = $region25
    $region24: #{_lambda_.1} parent=1 // pred_region
      %s981 = ssub.s32 128, 128
      %982 = vsyncadd [#allocation4], %s981
      %s984 = sshll.u32 [#allocation5], 4
      %s985 = int_to_ptr.vmem [resolvable:$true] %s984
      %987 = dma.vmem_to_hbm [thread:$0]  %s985, 128, %s4, [#allocation4]
    $region25: #{_lambda_.1} parent=1 // pred_fallthru
      _
    // Predicated region
    $region26: #{_lambda_.1} parent=1 // pred_check
      _
    $region27: #{_lambda_.1} parent=1 // pred_check_branch
      %989 = sbr.rel (0) target = $region29
    $region28: #{_lambda_.1} parent=1 // pred_region
      %990 = dma.done [#allocation4], 128
    $region29: #{_lambda_.1} parent=1 // pred_fallthru
      _
    %991 = vsyncpa [#allocation3], 1
    %992 = vsyncpa [#allocation4], 1

</llo_original>
